<compile_context>
chip_gen: v7x
topology: tpu7x:2x2x1
jax: 0.10.0
libtpu: 0.0.40
codegen_flags: <defaults>
</compile_context>

<pallas_src>
import math

import jax
import jax.numpy as jnp
from jax.experimental import pallas as pl
from jax.experimental.pallas import tpu as pltpu


def _round_up(n, m):
    return ((n + m - 1) // m) * m


def _pad2(a, rows, cols):
    r, c = a.shape
    return jnp.pad(a, ((0, rows - r), (0, cols - c)))


def _make_kernel(training: bool, has_t: bool):
    """Kernel specialized on (training, has_t) so unused refs are never passed."""

    def kernel(*refs):
        it = iter(refs)
        x_ref = next(it)
        t_ref = next(it) if has_t else None
        m1_ref = next(it) if training else None
        m2_ref = next(it) if training else None
        w1_ref = next(it)
        b1_ref = next(it)
        w2a_ref = next(it)
        w2b_ref = next(it) if has_t else None
        b2_ref = next(it)
        w3_ref = next(it)
        b3_ref = next(it)
        w4_ref = next(it)
        b4_ref = next(it)
        o_ref = next(it)

        def leaky(z):
            # F.leaky_relu(z, negative_slope=0.33)
            return jnp.where(z >= 0.0, z, 0.33 * z)

        # dense1 -> leaky -> dropout
        h = jnp.dot(x_ref[...].astype(jnp.bfloat16), w1_ref[...],
                    preferred_element_type=jnp.float32) + b1_ref[...]
        h = leaky(h)
        if training:
            h = h * m1_ref[...].astype(jnp.float32)

        # cat((h, t), dim=1) @ W2  ==  h @ W2a + t @ W2b
        h2 = jnp.dot(h.astype(jnp.bfloat16), w2a_ref[...],
                     preferred_element_type=jnp.float32)
        if has_t:
            h2 = h2 + jnp.dot(t_ref[...].astype(jnp.bfloat16), w2b_ref[...],
                              preferred_element_type=jnp.float32)
        h2 = leaky(h2 + b2_ref[...])
        if training:
            h2 = h2 * m2_ref[...].astype(jnp.float32)

        # dense3 -> leaky
        h3 = leaky(jnp.dot(h2.astype(jnp.bfloat16), w3_ref[...],
                           preferred_element_type=jnp.float32) + b3_ref[...])

        # dense4 -> leaky
        o_ref[...] = leaky(jnp.dot(h3.astype(jnp.bfloat16), w4_ref[...],
                                   preferred_element_type=jnp.float32)
                           + b4_ref[...])

    return kernel


def init_linear_blocks_params(key, l1, l2, nbr_tabular, nbr_classes_each):
    """Deterministic params.  Weights stored transposed: (in, out)."""

    def linear(k, fan_in, fan_out):
        kw, kb = jax.random.split(k)
        bound = 1.0 / math.sqrt(fan_in)
        w = jax.random.uniform(kw, (fan_in, fan_out), jnp.float32, -bound, bound)
        b = jax.random.uniform(kb, (1, fan_out), jnp.float32, -bound, bound)
        return w, b

    k1, k2, k3, k4 = jax.random.split(key, 4)
    w1, b1 = linear(k1, l1, l2)
    w2, b2 = linear(k2, l2 + nbr_tabular, l2)
    w3, b3 = linear(k3, l2, l2)
    w4, b4 = linear(k4, l2, nbr_classes_each)
    return dict(w1=w1, b1=b1, w2=w2, b2=b2, w3=w3, b3=b3, w4=w4, b4=b4)


def linear_blocks_forward(x, t, params, l2, nbr_tabular, *,
                          seed=0, training=True, tile_b_max=1024):
    """Pallas implementation of LinearBlocks.forward(x, t)."""
    B = x.shape[0]
    xf = x.reshape(B, -1)                      # torch .view(B, -1); free for NCHW
    l1 = xf.shape[1]
    n_out = params["w4"].shape[1]

    H_PAD = _round_up(l2, 128)                 # lane-dense hidden width
    O_PAD = _round_up(n_out, 128)              # lane-dense output width

    has_t = (t is not None) and (nbr_tabular > 0)

    # Batch tiling: TILE_B <= tile_b_max keeps double-buffered f32 x-tiles well under
    # the 32 MiB scoped-VMEM limit on every generation (v5e/v6e/v7x).
    tile_b = min(tile_b_max, _round_up(B, 8))
    padded_b = _round_up(B, tile_b)
    grid = (padded_b // tile_b,)

    if padded_b != B:
        xf = jnp.pad(xf, ((0, padded_b - B), (0, 0)))

    f32, bf16 = jnp.float32, jnp.bfloat16

    # Weights: pad to lane-dense widths, cast to bf16, keep VMEM-resident across grid.
    w1 = _pad2(params["w1"], l1, H_PAD).astype(bf16)
    b1 = _pad2(params["b1"].astype(f32), 1, H_PAD)
    w2a = _pad2(params["w2"][:l2, :], H_PAD, H_PAD).astype(bf16)
    b2 = _pad2(params["b2"].astype(f32), 1, H_PAD)
    w3 = _pad2(params["w3"], H_PAD, H_PAD).astype(bf16)
    b3 = _pad2(params["b3"].astype(f32), 1, H_PAD)
    w4 = _pad2(params["w4"], H_PAD, O_PAD).astype(bf16)
    b4 = _pad2(params["b4"].astype(f32), 1, O_PAD)

    tiled = lambda shape: pl.BlockSpec(shape, lambda i: (i, 0))       # streams with batch
    resident = lambda shape: pl.BlockSpec(shape, lambda i: (0, 0))    # stays in VMEM

    inputs = [xf]
    in_specs = [tiled((tile_b, l1))]

    if has_t:
        t_in = t
        if padded_b != B:
            t_in = jnp.pad(t_in, ((0, padded_b - B), (0, 0)))
        inputs.append(t_in)
        in_specs.append(tiled((tile_b, t_in.shape[1])))

    if training:
        # nn.Dropout(0.5), train mode: keep w.p. 0.5, scale kept activations by 2.
        k1, k2 = jax.random.split(jax.random.PRNGKey(seed))
        m1 = jnp.where(jax.random.bernoulli(k1, 0.5, (padded_b, H_PAD)), 2.0, 0.0).astype(bf16)
        m2 = jnp.where(jax.random.bernoulli(k2, 0.5, (padded_b, H_PAD)), 2.0, 0.0).astype(bf16)
        inputs += [m1, m2]
        in_specs += [tiled((tile_b, H_PAD)), tiled((tile_b, H_PAD))]

    inputs += [w1, b1, w2a]
    in_specs += [resident((l1, H_PAD)), resident((1, H_PAD)), resident((H_PAD, H_PAD))]
    if has_t:
        w2b_raw = params["w2"][l2:, :]
        w2b = _pad2(w2b_raw, w2b_raw.shape[0], H_PAD).astype(bf16)
        inputs.append(w2b)
        in_specs.append(resident(w2b.shape))
    inputs += [b2, w3, b3, w4, b4]
    in_specs += [resident((1, H_PAD)), resident((H_PAD, H_PAD)), resident((1, H_PAD)),
                 resident((H_PAD, O_PAD)), resident((1, O_PAD))]

    out = pl.pallas_call(
        _make_kernel(training, has_t),
        out_shape=jax.ShapeDtypeStruct((padded_b, O_PAD), jnp.float32),
        grid=grid,
        in_specs=in_specs,
        out_specs=tiled((tile_b, O_PAD)),
        compiler_params=pltpu.CompilerParams(
            dimension_semantics=("parallel",),        # v7x: shard batch grid over 2 TCs
            vmem_limit_bytes=32 * 1024 * 1024,        # keep double-buffering alive on v5e
        ),
    )(*inputs)

    return out[:B, :n_out]


def _reference_eval(x, t, params, l2, nbr_tabular):
    """Pure-JAX f32 reference of the eval-mode (dropout=identity) forward."""
    B = x.shape[0]

    def leaky(z):
        return jnp.where(z >= 0.0, z, 0.33 * z)

    h = leaky(x.reshape(B, -1) @ params["w1"] + params["b1"])
    if t is not None and nbr_tabular > 0:
        h_in, w2 = jnp.concatenate([h, t], axis=1), params["w2"]
    else:
        h_in, w2 = h, params["w2"][:l2, :]
    h = leaky(h_in @ w2 + params["b2"])
    h = leaky(h @ params["w3"] + params["b3"])
    return leaky(h @ params["w4"] + params["b4"])


if __name__ == "__main__":
    # Small shapes consistent with the module: x is a conv feature map (NCHW),
    # flattened to l1 = C*H*W features; t is the tabular side-input.
    B, C, H, W = 2, 4, 16, 16
    l1 = C * H * W            # 1024
    l2 = 32
    nbr_tabular = 4
    nbr_classes_each = 10

    key = jax.random.PRNGKey(0)
    kx, kt, kp = jax.random.split(key, 3)
    x = jax.random.normal(kx, (B, C, H, W), jnp.float32)
    t = jax.random.normal(kt, (B, nbr_tabular), jnp.float32)
    params = init_linear_blocks_params(kp, l1, l2, nbr_tabular, nbr_classes_each)

    # training-mode forward (dropout active) with tabular input
    out_train = linear_blocks_forward(x, t, params, l2, nbr_tabular,
                                      seed=0, training=True)
    jax.block_until_ready(out_train)
    assert out_train.shape == (B, nbr_classes_each)

    # eval-mode forward (dropout = identity), checked against a pure-JAX f32 reference
    out_eval = linear_blocks_forward(x, t, params, l2, nbr_tabular, training=False)
    jax.block_until_ready(out_eval)
    ref = _reference_eval(x, t, params, l2, nbr_tabular)
    assert jnp.allclose(out_eval, ref, rtol=5e-2, atol=5e-2), \
        float(jnp.max(jnp.abs(out_eval - ref)))

    # eval-mode, t=None path (specialized kernel without the t matmul)
    out_none = linear_blocks_forward(x, None, params, l2, nbr_tabular, training=False)
    jax.block_until_ready(out_none)
    assert out_none.shape == (B, nbr_classes_each)

    print("KERNEL_OK")
</pallas_src>

<mosaic_0001>
module attributes {stable_mosaic.version = 11 : i64} {
  func.func @kernel(%arg0: i32, %arg1: memref<8x1024xf32, #tpu.memory_space<vmem>>, %arg2: memref<8x4xf32, #tpu.memory_space<vmem>>, %arg3: memref<8x128xbf16, #tpu.memory_space<vmem>>, %arg4: memref<8x128xbf16, #tpu.memory_space<vmem>>, %arg5: memref<1024x128xbf16, #tpu.memory_space<vmem>>, %arg6: memref<1x128xf32, #tpu.memory_space<vmem>>, %arg7: memref<128x128xbf16, #tpu.memory_space<vmem>>, %arg8: memref<4x128xbf16, #tpu.memory_space<vmem>>, %arg9: memref<1x128xf32, #tpu.memory_space<vmem>>, %arg10: memref<128x128xbf16, #tpu.memory_space<vmem>>, %arg11: memref<1x128xf32, #tpu.memory_space<vmem>>, %arg12: memref<128x128xbf16, #tpu.memory_space<vmem>>, %arg13: memref<1x128xf32, #tpu.memory_space<vmem>>, %arg14: memref<8x128xf32, #tpu.memory_space<vmem>>) attributes {dimension_semantics = [#tpu.dimension_semantics<parallel>], iteration_bounds = array<i64: 1>, scalar_prefetch = 0 : i64, scratch_operands = 0 : i64, tpu.core_type = #tpu.core_type<tc>, window_params = [{transform_indices = @transform_0, window_bounds = array<i64: 8, 1024>}, {transform_indices = @transform_1, window_bounds = array<i64: 8, 4>}, {transform_indices = @transform_2, window_bounds = array<i64: 8, 128>}, {transform_indices = @transform_3, window_bounds = array<i64: 8, 128>}, {pipeline_mode = #tpu.pipeline_mode<synchronous>, transform_indices = @transform_4, window_bounds = array<i64: 1024, 128>}, {pipeline_mode = #tpu.pipeline_mode<synchronous>, transform_indices = @transform_5, window_bounds = array<i64: 1, 128>}, {pipeline_mode = #tpu.pipeline_mode<synchronous>, transform_indices = @transform_6, window_bounds = array<i64: 128, 128>}, {pipeline_mode = #tpu.pipeline_mode<synchronous>, transform_indices = @transform_7, window_bounds = array<i64: 4, 128>}, {pipeline_mode = #tpu.pipeline_mode<synchronous>, transform_indices = @transform_8, window_bounds = array<i64: 1, 128>}, {pipeline_mode = #tpu.pipeline_mode<synchronous>, transform_indices = @transform_9, window_bounds = array<i64: 128, 128>}, {pipeline_mode = #tpu.pipeline_mode<synchronous>, transform_indices = @transform_10, window_bounds = array<i64: 1, 128>}, {pipeline_mode = #tpu.pipeline_mode<synchronous>, transform_indices = @transform_11, window_bounds = array<i64: 128, 128>}, {pipeline_mode = #tpu.pipeline_mode<synchronous>, transform_indices = @transform_12, window_bounds = array<i64: 1, 128>}, {transform_indices = @transform_13, window_bounds = array<i64: 8, 128>}]} {
    %c0 = arith.constant 0 : index
    %c0_0 = arith.constant 0 : index
    %0 = vector.load %arg1[%c0, %c0_0] : memref<8x1024xf32, #tpu.memory_space<vmem>>, vector<8x1024xf32>
    %1 = arith.truncf %0 : vector<8x1024xf32> to vector<8x1024xbf16>
    %c0_1 = arith.constant 0 : index
    %c0_2 = arith.constant 0 : index
    %2 = vector.load %arg5[%c0_1, %c0_2] : memref<1024x128xbf16, #tpu.memory_space<vmem>>, vector<1024x128xbf16>
    %cst = arith.constant dense<0.000000e+00> : vector<8x128xf32>
    %3 = tpu.matmul %1, %2, %cst {dimension_numbers = #tpu.dot_dimension_numbers<[1], [0], [0], [1], [0, 0, 1, 1], [], []>} : vector<8x1024xbf16>, vector<1024x128xbf16>, vector<8x128xf32> -> vector<8x128xf32>
    %c0_3 = arith.constant 0 : index
    %c0_4 = arith.constant 0 : index
    %4 = vector.load %arg6[%c0_3, %c0_4] : memref<1x128xf32, #tpu.memory_space<vmem>>, vector<1x128xf32>
    %5 = vector.broadcast %4 : vector<1x128xf32> to vector<8x128xf32>
    %6 = arith.addf %3, %5 : vector<8x128xf32>
    %cst_5 = arith.constant 0.000000e+00 : f32
    %7 = vector.broadcast %cst_5 : f32 to vector<8x128xf32>
    %8 = arith.cmpf oge, %6, %7 : vector<8x128xf32>
    %cst_6 = arith.constant 3.300000e-01 : f32
    %9 = vector.broadcast %cst_6 : f32 to vector<8x128xf32>
    %10 = arith.mulf %9, %6 : vector<8x128xf32>
    %11 = arith.select %8, %6, %10 : vector<8x128xi1>, vector<8x128xf32>
    %c0_7 = arith.constant 0 : index
    %c0_8 = arith.constant 0 : index
    %12 = vector.load %arg3[%c0_7, %c0_8] : memref<8x128xbf16, #tpu.memory_space<vmem>>, vector<8x128xbf16>
    %13 = arith.extf %12 : vector<8x128xbf16> to vector<8x128xf32>
    %14 = arith.mulf %11, %13 : vector<8x128xf32>
    %15 = arith.truncf %14 : vector<8x128xf32> to vector<8x128xbf16>
    %c0_9 = arith.constant 0 : index
    %c0_10 = arith.constant 0 : index
    %16 = vector.load %arg7[%c0_9, %c0_10] : memref<128x128xbf16, #tpu.memory_space<vmem>>, vector<128x128xbf16>
    %cst_11 = arith.constant dense<0.000000e+00> : vector<8x128xf32>
    %17 = tpu.matmul %15, %16, %cst_11 {dimension_numbers = #tpu.dot_dimension_numbers<[1], [0], [0], [1], [0, 0, 1, 1], [], []>} : vector<8x128xbf16>, vector<128x128xbf16>, vector<8x128xf32> -> vector<8x128xf32>
    %c0_12 = arith.constant 0 : index
    %c0_13 = arith.constant 0 : index
    %18 = vector.load %arg2[%c0_12, %c0_13] : memref<8x4xf32, #tpu.memory_space<vmem>>, vector<8x4xf32>
    %19 = arith.truncf %18 : vector<8x4xf32> to vector<8x4xbf16>
    %c0_14 = arith.constant 0 : index
    %c0_15 = arith.constant 0 : index
    %20 = vector.load %arg8[%c0_14, %c0_15] : memref<4x128xbf16, #tpu.memory_space<vmem>>, vector<4x128xbf16>
    %cst_16 = arith.constant dense<0.000000e+00> : vector<8x128xf32>
    %21 = tpu.matmul %19, %20, %cst_16 {dimension_numbers = #tpu.dot_dimension_numbers<[1], [0], [0], [1], [0, 0, 1, 1], [], []>} : vector<8x4xbf16>, vector<4x128xbf16>, vector<8x128xf32> -> vector<8x128xf32>
    %22 = arith.addf %17, %21 : vector<8x128xf32>
    %c0_17 = arith.constant 0 : index
    %c0_18 = arith.constant 0 : index
    %23 = vector.load %arg9[%c0_17, %c0_18] : memref<1x128xf32, #tpu.memory_space<vmem>>, vector<1x128xf32>
    %24 = vector.broadcast %23 : vector<1x128xf32> to vector<8x128xf32>
    %25 = arith.addf %22, %24 : vector<8x128xf32>
    %cst_19 = arith.constant 0.000000e+00 : f32
    %26 = vector.broadcast %cst_19 : f32 to vector<8x128xf32>
    %27 = arith.cmpf oge, %25, %26 : vector<8x128xf32>
    %cst_20 = arith.constant 3.300000e-01 : f32
    %28 = vector.broadcast %cst_20 : f32 to vector<8x128xf32>
    %29 = arith.mulf %28, %25 : vector<8x128xf32>
    %30 = arith.select %27, %25, %29 : vector<8x128xi1>, vector<8x128xf32>
    %c0_21 = arith.constant 0 : index
    %c0_22 = arith.constant 0 : index
    %31 = vector.load %arg4[%c0_21, %c0_22] : memref<8x128xbf16, #tpu.memory_space<vmem>>, vector<8x128xbf16>
    %32 = arith.extf %31 : vector<8x128xbf16> to vector<8x128xf32>
    %33 = arith.mulf %30, %32 : vector<8x128xf32>
    %34 = arith.truncf %33 : vector<8x128xf32> to vector<8x128xbf16>
    %c0_23 = arith.constant 0 : index
    %c0_24 = arith.constant 0 : index
    %35 = vector.load %arg10[%c0_23, %c0_24] : memref<128x128xbf16, #tpu.memory_space<vmem>>, vector<128x128xbf16>
    %cst_25 = arith.constant dense<0.000000e+00> : vector<8x128xf32>
    %36 = tpu.matmul %34, %35, %cst_25 {dimension_numbers = #tpu.dot_dimension_numbers<[1], [0], [0], [1], [0, 0, 1, 1], [], []>} : vector<8x128xbf16>, vector<128x128xbf16>, vector<8x128xf32> -> vector<8x128xf32>
    %c0_26 = arith.constant 0 : index
    %c0_27 = arith.constant 0 : index
    %37 = vector.load %arg11[%c0_26, %c0_27] : memref<1x128xf32, #tpu.memory_space<vmem>>, vector<1x128xf32>
    %38 = vector.broadcast %37 : vector<1x128xf32> to vector<8x128xf32>
    %39 = arith.addf %36, %38 : vector<8x128xf32>
    %cst_28 = arith.constant 0.000000e+00 : f32
    %40 = vector.broadcast %cst_28 : f32 to vector<8x128xf32>
    %41 = arith.cmpf oge, %39, %40 : vector<8x128xf32>
    %cst_29 = arith.constant 3.300000e-01 : f32
    %42 = vector.broadcast %cst_29 : f32 to vector<8x128xf32>
    %43 = arith.mulf %42, %39 : vector<8x128xf32>
    %44 = arith.select %41, %39, %43 : vector<8x128xi1>, vector<8x128xf32>
    %45 = arith.truncf %44 : vector<8x128xf32> to vector<8x128xbf16>
    %c0_30 = arith.constant 0 : index
    %c0_31 = arith.constant 0 : index
    %46 = vector.load %arg12[%c0_30, %c0_31] : memref<128x128xbf16, #tpu.memory_space<vmem>>, vector<128x128xbf16>
    %cst_32 = arith.constant dense<0.000000e+00> : vector<8x128xf32>
    %47 = tpu.matmul %45, %46, %cst_32 {dimension_numbers = #tpu.dot_dimension_numbers<[1], [0], [0], [1], [0, 0, 1, 1], [], []>} : vector<8x128xbf16>, vector<128x128xbf16>, vector<8x128xf32> -> vector<8x128xf32>
    %c0_33 = arith.constant 0 : index
    %c0_34 = arith.constant 0 : index
    %48 = vector.load %arg13[%c0_33, %c0_34] : memref<1x128xf32, #tpu.memory_space<vmem>>, vector<1x128xf32>
    %49 = vector.broadcast %48 : vector<1x128xf32> to vector<8x128xf32>
    %50 = arith.addf %47, %49 : vector<8x128xf32>
    %cst_35 = arith.constant 0.000000e+00 : f32
    %51 = vector.broadcast %cst_35 : f32 to vector<8x128xf32>
    %52 = arith.cmpf oge, %50, %51 : vector<8x128xf32>
    %cst_36 = arith.constant 3.300000e-01 : f32
    %53 = vector.broadcast %cst_36 : f32 to vector<8x128xf32>
    %54 = arith.mulf %53, %50 : vector<8x128xf32>
    %55 = arith.select %52, %50, %54 : vector<8x128xi1>, vector<8x128xf32>
    %c0_37 = arith.constant 0 : index
    %c0_38 = arith.constant 0 : index
    %56 = vector.load %arg14[%c0_37, %c0_38] : memref<8x128xf32, #tpu.memory_space<vmem>>, vector<8x128xf32>
    tpu.vector_store %arg14[%c0_37, %c0_38], %55 {strides = array<i32>} : memref<8x128xf32, #tpu.memory_space<vmem>>, vector<8x128xf32>,
    return
  }
  func.func @transform_0(%arg0: i32) -> (i32, i32) {
    %c0_i32 = arith.constant 0 : i32
    %c0_i32_0 = arith.constant 0 : i32
    return %arg0, %c0_i32 : i32, i32
  }
  func.func @transform_1(%arg0: i32) -> (i32, i32) {
    %c0_i32 = arith.constant 0 : i32
    %c0_i32_0 = arith.constant 0 : i32
    return %arg0, %c0_i32 : i32, i32
  }
  func.func @transform_2(%arg0: i32) -> (i32, i32) {
    %c0_i32 = arith.constant 0 : i32
    %c0_i32_0 = arith.constant 0 : i32
    return %arg0, %c0_i32 : i32, i32
  }
  func.func @transform_3(%arg0: i32) -> (i32, i32) {
    %c0_i32 = arith.constant 0 : i32
    %c0_i32_0 = arith.constant 0 : i32
    return %arg0, %c0_i32 : i32, i32
  }
  func.func @transform_4(%arg0: i32) -> (i32, i32) {
    %c0_i32 = arith.constant 0 : i32
    %c0_i32_0 = arith.constant 0 : i32
    %c0_i32_1 = arith.constant 0 : i32
    return %c0_i32, %c0_i32_0 : i32, i32
  }
  func.func @transform_5(%arg0: i32) -> (i32, i32) {
    %c0_i32 = arith.constant 0 : i32
    %c0_i32_0 = arith.constant 0 : i32
    %c0_i32_1 = arith.constant 0 : i32
    return %c0_i32, %c0_i32_0 : i32, i32
  }
  func.func @transform_6(%arg0: i32) -> (i32, i32) {
    %c0_i32 = arith.constant 0 : i32
    %c0_i32_0 = arith.constant 0 : i32
    %c0_i32_1 = arith.constant 0 : i32
    return %c0_i32, %c0_i32_0 : i32, i32
  }
  func.func @transform_7(%arg0: i32) -> (i32, i32) {
    %c0_i32 = arith.constant 0 : i32
    %c0_i32_0 = arith.constant 0 : i32
    %c0_i32_1 = arith.constant 0 : i32
    return %c0_i32, %c0_i32_0 : i32, i32
  }
  func.func @transform_8(%arg0: i32) -> (i32, i32) {
    %c0_i32 = arith.constant 0 : i32
    %c0_i32_0 = arith.constant 0 : i32
    %c0_i32_1 = arith.constant 0 : i32
    return %c0_i32, %c0_i32_0 : i32, i32
  }
  func.func @transform_9(%arg0: i32) -> (i32, i32) {
    %c0_i32 = arith.constant 0 : i32
    %c0_i32_0 = arith.constant 0 : i32
    %c0_i32_1 = arith.constant 0 : i32
    return %c0_i32, %c0_i32_0 : i32, i32
  }
  func.func @transform_10(%arg0: i32) -> (i32, i32) {
    %c0_i32 = arith.constant 0 : i32
    %c0_i32_0 = arith.constant 0 : i32
    %c0_i32_1 = arith.constant 0 : i32
    return %c0_i32, %c0_i32_0 : i32, i32
  }
  func.func @transform_11(%arg0: i32) -> (i32, i32) {
    %c0_i32 = arith.constant 0 : i32
    %c0_i32_0 = arith.constant 0 : i32
    %c0_i32_1 = arith.constant 0 : i32
    return %c0_i32, %c0_i32_0 : i32, i32
  }
  func.func @transform_12(%arg0: i32) -> (i32, i32) {
    %c0_i32 = arith.constant 0 : i32
    %c0_i32_0 = arith.constant 0 : i32
    %c0_i32_1 = arith.constant 0 : i32
    return %c0_i32, %c0_i32_0 : i32, i32
  }
  func.func @transform_13(%arg0: i32) -> (i32, i32) {
    %c0_i32 = arith.constant 0 : i32
    %c0_i32_0 = arith.constant 0 : i32
    return %arg0, %c0_i32 : i32, i32
  }
}

</mosaic_0001>

<llo_original>
// kernel: tpu_custom_call.1
$region0: #{tpu_custom_call.1}
  #allocation0 [shape = 'u32[]', space=smem, size = 0x4, offset = 0x4, fixed_abs, tag = 'smem constant byte address 0x4 - core index']
  #allocation1 [shape = 'u32[144,128]{1,0:T(1,128)}', space=vmem, size = 0x12000, scoped, tag = 'internal scratch']
  %s0 = inlined_call_operand.hbm [shape: f32[8,1024], index: 0, kind: input, shape index: {}]
  %s1 = inlined_call_operand.vmem [shape: f32[8,4], index: 1, kind: input, shape index: {}]
  %s2 = inlined_call_operand.vmem [shape: bf16[8,128], index: 2, kind: input, shape index: {}]
  %s3 = inlined_call_operand.vmem [shape: bf16[8,128], index: 3, kind: input, shape index: {}]
  %s4 = inlined_call_operand.hbm [shape: bf16[1024,128], index: 4, kind: input, shape index: {}]
  %s5 = inlined_call_operand.vmem [shape: f32[1,128], index: 5, kind: input, shape index: {}]
  %s6 = inlined_call_operand.hbm [shape: bf16[128,128], index: 6, kind: input, shape index: {}]
  %s7 = inlined_call_operand.vmem [shape: bf16[4,128], index: 7, kind: input, shape index: {}]
  %s8 = inlined_call_operand.vmem [shape: f32[1,128], index: 8, kind: input, shape index: {}]
  %s9 = inlined_call_operand.hbm [shape: bf16[128,128], index: 9, kind: input, shape index: {}]
  %s10 = inlined_call_operand.vmem [shape: f32[1,128], index: 10, kind: input, shape index: {}]
  %s11 = inlined_call_operand.hbm [shape: bf16[128,128], index: 11, kind: input, shape index: {}]
  %s12 = inlined_call_operand.vmem [shape: f32[1,128], index: 12, kind: input, shape index: {}]
  %s13 = inlined_call_operand.hbm [shape: f32[8,128], index: 13, kind: output, shape index: {}]
  %s14 = sld [smem:[#allocation0]]
  $region82: #{tpu_custom_call.1} parent=0
    _
  %s16 = ssub.s32 1, %s14
  %s17 = scalar_select 0, %s16, %s14
  $region1: #{tpu_custom_call.1} parent=0
    #allocation2 [shape = 'u8[32768]{0}', space=vmem, size = 0x8000, scoped, tag = 'input window, operand 0, single buffered']
    #allocation3 [shape = 's32[1]{0}', space=sflag, size = 0x4, scoped, tag = 'scoped memory for tpu_custom_call.1']
    #allocation4 [shape = 's32[1]{0}', space=sflag, size = 0x4, scoped, tag = 'scoped memory for tpu_custom_call.1']
    #allocation5 [shape = 'u8[262144]{0}', space=vmem, size = 0x40000, scoped, tag = 'input window, operand 4, single buffered']
    #allocation6 [shape = 's32[1]{0}', space=sflag, size = 0x4, scoped, tag = 'scoped memory for tpu_custom_call.1']
    #allocation7 [shape = 'u8[32768]{0}', space=vmem, size = 0x8000, scoped, tag = 'input window, operand 6, single buffered']
    #allocation8 [shape = 'u8[32768]{0}', space=vmem, size = 0x8000, scoped, tag = 'input window, operand 9, single buffered']
    #allocation9 [shape = 's32[1]{0}', space=sflag, size = 0x4, scoped, tag = 'scoped memory for tpu_custom_call.1']
    #allocation10 [shape = 'u8[32768]{0}', space=vmem, size = 0x8000, scoped, tag = 'input window, operand 11, single buffered']
    #allocation11 [shape = 'u8[4096]{0}', space=vmem, size = 0x1000, scoped, tag = 'output window, operand 0, single buffered']
    %18 = vsyncpa [#allocation3], 0
    %19 = vsyncpa [#allocation6], 0
    %20 = vsyncpa [#allocation9], 0
    %21 = vsyncpa [#allocation4], 0
    // Predicated region
    $region2: #{tpu_custom_call.1} parent=1 // pred_check
      _
    $region3: #{tpu_custom_call.1} parent=1 // pred_check_branch
      %23 = sbr.rel (0) target = $region5
    $region4: #{tpu_custom_call.1} parent=1 // pred_region
      %s25 = ssub.s32 1024, 1024
      %26 = vsyncadd [#allocation3], %s25
      %s28 = sshll.u32 [#allocation2], 4
      %s29 = int_to_ptr.vmem [resolvable:$true] %s28
      %31 = dma.hbm_to_vmem [thread:$0]  %s0, 1024, %s29, [#allocation3]
    $region5: #{tpu_custom_call.1} parent=1 // pred_fallthru
      _
    // Predicated region
    $region6: #{tpu_custom_call.1} parent=1 // pred_check
      _
    $region7: #{tpu_custom_call.1} parent=1 // pred_check_branch
      %33 = sbr.rel (0) target = $region9
    $region8: #{tpu_custom_call.1} parent=1 // pred_region
      _
    $region9: #{tpu_custom_call.1} parent=1 // pred_fallthru
      _
    // Predicated region
    $region10: #{tpu_custom_call.1} parent=1 // pred_check
      _
    $region11: #{tpu_custom_call.1} parent=1 // pred_check_branch
      %35 = sbr.rel (0) target = $region13
    $region12: #{tpu_custom_call.1} parent=1 // pred_region
      _
    $region13: #{tpu_custom_call.1} parent=1 // pred_fallthru
      _
    // Predicated region
    $region14: #{tpu_custom_call.1} parent=1 // pred_check
      _
    $region15: #{tpu_custom_call.1} parent=1 // pred_check_branch
      %37 = sbr.rel (0) target = $region17
    $region16: #{tpu_custom_call.1} parent=1 // pred_region
      _
    $region17: #{tpu_custom_call.1} parent=1 // pred_fallthru
      _
    // Predicated region
    $region18: #{tpu_custom_call.1} parent=1 // pred_check
      _
    $region19: #{tpu_custom_call.1} parent=1 // pred_check_branch
      %39 = sbr.rel (0) target = $region21
    $region20: #{tpu_custom_call.1} parent=1 // pred_region
      %s41 = ssub.s32 8192, 8192
      %42 = vsyncadd [#allocation6], %s41
      %s43 = sshll.u32 [#allocation5], 4
      %s44 = int_to_ptr.vmem [resolvable:$true] %s43
      %49 = dma.hbm_to_vmem [thread:$0]  %s4, 8192, %s44, [#allocation6], 64, 64, 4
    $region21: #{tpu_custom_call.1} parent=1 // pred_fallthru
      _
    // Predicated region
    $region22: #{tpu_custom_call.1} parent=1 // pred_check
      _
    $region23: #{tpu_custom_call.1} parent=1 // pred_check_branch
      %51 = sbr.rel (0) target = $region25
    $region24: #{tpu_custom_call.1} parent=1 // pred_region
      _
    $region25: #{tpu_custom_call.1} parent=1 // pred_fallthru
      _
    // Predicated region
    $region26: #{tpu_custom_call.1} parent=1 // pred_check
      _
    $region27: #{tpu_custom_call.1} parent=1 // pred_check_branch
      %53 = sbr.rel (0) target = $region29
    $region28: #{tpu_custom_call.1} parent=1 // pred_region
      %s55 = ssub.s32 1024, 1024
      %56 = vsyncadd [#allocation6], %s55
      %s57 = sshll.u32 [#allocation7], 4
      %s58 = int_to_ptr.vmem [resolvable:$true] %s57
      %63 = dma.hbm_to_vmem [thread:$0]  %s6, 1024, %s58, [#allocation6], 64, 64, 4
    $region29: #{tpu_custom_call.1} parent=1 // pred_fallthru
      _
    // Predicated region
    $region30: #{tpu_custom_call.1} parent=1 // pred_check
      _
    $region31: #{tpu_custom_call.1} parent=1 // pred_check_branch
      %65 = sbr.rel (0) target = $region33
    $region32: #{tpu_custom_call.1} parent=1 // pred_region
      _
    $region33: #{tpu_custom_call.1} parent=1 // pred_fallthru
      _
    // Predicated region
    $region34: #{tpu_custom_call.1} parent=1 // pred_check
      _
    $region35: #{tpu_custom_call.1} parent=1 // pred_check_branch
      %67 = sbr.rel (0) target = $region37
    $region36: #{tpu_custom_call.1} parent=1 // pred_region
      _
    $region37: #{tpu_custom_call.1} parent=1 // pred_fallthru
      _
    // Predicated region
    $region38: #{tpu_custom_call.1} parent=1 // pred_check
      _
    $region39: #{tpu_custom_call.1} parent=1 // pred_check_branch
      %69 = sbr.rel (0) target = $region41
    $region40: #{tpu_custom_call.1} parent=1 // pred_region
      %s71 = ssub.s32 1024, 1024
      %72 = vsyncadd [#allocation9], %s71
      %s73 = sshll.u32 [#allocation8], 4
      %s74 = int_to_ptr.vmem [resolvable:$true] %s73
      %79 = dma.hbm_to_vmem [thread:$0]  %s9, 1024, %s74, [#allocation9], 64, 64, 4
    $region41: #{tpu_custom_call.1} parent=1 // pred_fallthru
      _
    // Predicated region
    $region42: #{tpu_custom_call.1} parent=1 // pred_check
      _
    $region43: #{tpu_custom_call.1} parent=1 // pred_check_branch
      %81 = sbr.rel (0) target = $region45
    $region44: #{tpu_custom_call.1} parent=1 // pred_region
      _
    $region45: #{tpu_custom_call.1} parent=1 // pred_fallthru
      _
    // Predicated region
    $region46: #{tpu_custom_call.1} parent=1 // pred_check
      _
    $region47: #{tpu_custom_call.1} parent=1 // pred_check_branch
      %83 = sbr.rel (0) target = $region49
    $region48: #{tpu_custom_call.1} parent=1 // pred_region
      %s85 = ssub.s32 1024, 1024
      %86 = vsyncadd [#allocation9], %s85
      %s87 = sshll.u32 [#allocation10], 4
      %s88 = int_to_ptr.vmem [resolvable:$true] %s87
      %93 = dma.hbm_to_vmem [thread:$0]  %s11, 1024, %s88, [#allocation9], 64, 64, 4
    $region49: #{tpu_custom_call.1} parent=1 // pred_fallthru
      _
    // Predicated region
    $region50: #{tpu_custom_call.1} parent=1 // pred_check
      _
    $region51: #{tpu_custom_call.1} parent=1 // pred_check_branch
      %95 = sbr.rel (0) target = $region53
    $region52: #{tpu_custom_call.1} parent=1 // pred_region
      _
    $region53: #{tpu_custom_call.1} parent=1 // pred_fallthru
      _
    // Predicated region
    $region54: #{tpu_custom_call.1} parent=1 // pred_check
      _
    $region55: #{tpu_custom_call.1} parent=1 // pred_check_branch
      %97 = sbr.rel (0) target = $region57
    $region56: #{tpu_custom_call.1} parent=1 // pred_region
      %98 = dma.done [#allocation3], 1024
    $region57: #{tpu_custom_call.1} parent=1 // pred_fallthru
      _
    // Predicated region
    $region58: #{tpu_custom_call.1} parent=1 // pred_check
      _
    $region59: #{tpu_custom_call.1} parent=1 // pred_check_branch
      %100 = sbr.rel (0) target = $region61
    $region60: #{tpu_custom_call.1} parent=1 // pred_region
      %101 = dma.done [#allocation6], 8192
    $region61: #{tpu_custom_call.1} parent=1 // pred_fallthru
      _
    // Predicated region
    $region62: #{tpu_custom_call.1} parent=1 // pred_check
      _
    $region63: #{tpu_custom_call.1} parent=1 // pred_check_branch
      %103 = sbr.rel (0) target = $region65
    $region64: #{tpu_custom_call.1} parent=1 // pred_region
      %104 = dma.done [#allocation6], 1024
    $region65: #{tpu_custom_call.1} parent=1 // pred_fallthru
      _
    // Predicated region
    $region66: #{tpu_custom_call.1} parent=1 // pred_check
      _
    $region67: #{tpu_custom_call.1} parent=1 // pred_check_branch
      %106 = sbr.rel (0) target = $region69
    $region68: #{tpu_custom_call.1} parent=1 // pred_region
      %107 = dma.done [#allocation9], 1024
    $region69: #{tpu_custom_call.1} parent=1 // pred_fallthru
      _
    // Predicated region
    $region70: #{tpu_custom_call.1} parent=1 // pred_check
      _
    $region71: #{tpu_custom_call.1} parent=1 // pred_check_branch
      %109 = sbr.rel (0) target = $region73
    $region72: #{tpu_custom_call.1} parent=1 // pred_region
      %110 = dma.done [#allocation9], 1024
    $region73: #{tpu_custom_call.1} parent=1 // pred_fallthru
      _
    %v112 = vld [vmem:[#allocation2] sm:$0xff]
    %v113 = vld [vmem:[#allocation2 + $0x8] sm:$0xff]
    %v114 = vld [vmem:[#allocation2 + $0x10] sm:$0xff]
    %v115 = vld [vmem:[#allocation2 + $0x18] sm:$0xff]
    %v116 = vld [vmem:[#allocation2 + $0x20] sm:$0xff]
    %v117 = vld [vmem:[#allocation2 + $0x28] sm:$0xff]
    %v118 = vld [vmem:[#allocation2 + $0x30] sm:$0xff]
    %v119 = vld [vmem:[#allocation2 + $0x38] sm:$0xff]
    %v120 = vpack.c.bf16 %v112, %v112
    %v121 = vpack.c.bf16 %v113, %v113
    %v122 = vpack.c.bf16 %v114, %v114
    %v123 = vpack.c.bf16 %v115, %v115
    %v124 = vpack.c.bf16 %v116, %v116
    %v125 = vpack.c.bf16 %v117, %v117
    %v126 = vpack.c.bf16 %v118, %v118
    %v127 = vpack.c.bf16 %v119, %v119
    %v128 = vld [vmem:[#allocation5] sm:$0xf]
    %v129 = vld [vmem:[#allocation5 + $0x4] sm:$0xf]
    %v130 = vld [vmem:[#allocation5 + $0x8] sm:$0xf]
    %v131 = vld [vmem:[#allocation5 + $0xc] sm:$0xf]
    %v132 = vld [vmem:[#allocation5 + $0x10] sm:$0xf]
    %v133 = vld [vmem:[#allocation5 + $0x14] sm:$0xf]
    %v134 = vld [vmem:[#allocation5 + $0x18] sm:$0xf]
    %v135 = vld [vmem:[#allocation5 + $0x1c] sm:$0xf]
    %v136 = vld [vmem:[#allocation5 + $0x20] sm:$0xf]
    %v137 = vld [vmem:[#allocation5 + $0x24] sm:$0xf]
    %v138 = vld [vmem:[#allocation5 + $0x28] sm:$0xf]
    %v139 = vld [vmem:[#allocation5 + $0x2c] sm:$0xf]
    %v140 = vld [vmem:[#allocation5 + $0x30] sm:$0xf]
    %v141 = vld [vmem:[#allocation5 + $0x34] sm:$0xf]
    %v142 = vld [vmem:[#allocation5 + $0x38] sm:$0xf]
    %v143 = vld [vmem:[#allocation5 + $0x3c] sm:$0xf]
    %v144 = vld [vmem:[#allocation5 + $0x40] sm:$0xf]
    %v145 = vld [vmem:[#allocation5 + $0x44] sm:$0xf]
    %v146 = vld [vmem:[#allocation5 + $0x48] sm:$0xf]
    %v147 = vld [vmem:[#allocation5 + $0x4c] sm:$0xf]
    %v148 = vld [vmem:[#allocation5 + $0x50] sm:$0xf]
    %v149 = vld [vmem:[#allocation5 + $0x54] sm:$0xf]
    %v150 = vld [vmem:[#allocation5 + $0x58] sm:$0xf]
    %v151 = vld [vmem:[#allocation5 + $0x5c] sm:$0xf]
    %v152 = vld [vmem:[#allocation5 + $0x60] sm:$0xf]
    %v153 = vld [vmem:[#allocation5 + $0x64] sm:$0xf]
    %v154 = vld [vmem:[#allocation5 + $0x68] sm:$0xf]
    %v155 = vld [vmem:[#allocation5 + $0x6c] sm:$0xf]
    %v156 = vld [vmem:[#allocation5 + $0x70] sm:$0xf]
    %v157 = vld [vmem:[#allocation5 + $0x74] sm:$0xf]
    %v158 = vld [vmem:[#allocation5 + $0x78] sm:$0xf]
    %v159 = vld [vmem:[#allocation5 + $0x7c] sm:$0xf]
    %v160 = vld [vmem:[#allocation5 + $0x80] sm:$0xf]
    %v161 = vld [vmem:[#allocation5 + $0x84] sm:$0xf]
    %v162 = vld [vmem:[#allocation5 + $0x88] sm:$0xf]
    %v163 = vld [vmem:[#allocation5 + $0x8c] sm:$0xf]
    %v164 = vld [vmem:[#allocation5 + $0x90] sm:$0xf]
    %v165 = vld [vmem:[#allocation5 + $0x94] sm:$0xf]
    %v166 = vld [vmem:[#allocation5 + $0x98] sm:$0xf]
    %v167 = vld [vmem:[#allocation5 + $0x9c] sm:$0xf]
    %v168 = vld [vmem:[#allocation5 + $0xa0] sm:$0xf]
    %v169 = vld [vmem:[#allocation5 + $0xa4] sm:$0xf]
    %v170 = vld [vmem:[#allocation5 + $0xa8] sm:$0xf]
    %v171 = vld [vmem:[#allocation5 + $0xac] sm:$0xf]
    %v172 = vld [vmem:[#allocation5 + $0xb0] sm:$0xf]
    %v173 = vld [vmem:[#allocation5 + $0xb4] sm:$0xf]
    %v174 = vld [vmem:[#allocation5 + $0xb8] sm:$0xf]
    %v175 = vld [vmem:[#allocation5 + $0xbc] sm:$0xf]
    %v176 = vld [vmem:[#allocation5 + $0xc0] sm:$0xf]
    %v177 = vld [vmem:[#allocation5 + $0xc4] sm:$0xf]
    %v178 = vld [vmem:[#allocation5 + $0xc8] sm:$0xf]
    %v179 = vld [vmem:[#allocation5 + $0xcc] sm:$0xf]
    %v180 = vld [vmem:[#allocation5 + $0xd0] sm:$0xf]
    %v181 = vld [vmem:[#allocation5 + $0xd4] sm:$0xf]
    %v182 = vld [vmem:[#allocation5 + $0xd8] sm:$0xf]
    %v183 = vld [vmem:[#allocation5 + $0xdc] sm:$0xf]
    %v184 = vld [vmem:[#allocation5 + $0xe0] sm:$0xf]
    %v185 = vld [vmem:[#allocation5 + $0xe4] sm:$0xf]
    %v186 = vld [vmem:[#allocation5 + $0xe8] sm:$0xf]
    %v187 = vld [vmem:[#allocation5 + $0xec] sm:$0xf]
    %v188 = vld [vmem:[#allocation5 + $0xf0] sm:$0xf]
    %v189 = vld [vmem:[#allocation5 + $0xf4] sm:$0xf]
    %v190 = vld [vmem:[#allocation5 + $0xf8] sm:$0xf]
    %v191 = vld [vmem:[#allocation5 + $0xfc] sm:$0xf]
    %v192 = vld [vmem:[#allocation5 + $0x100] sm:$0xf]
    %v193 = vld [vmem:[#allocation5 + $0x104] sm:$0xf]
    %v194 = vld [vmem:[#allocation5 + $0x108] sm:$0xf]
    %v195 = vld [vmem:[#allocation5 + $0x10c] sm:$0xf]
    %v196 = vld [vmem:[#allocation5 + $0x110] sm:$0xf]
    %v197 = vld [vmem:[#allocation5 + $0x114] sm:$0xf]
    %v198 = vld [vmem:[#allocation5 + $0x118] sm:$0xf]
    %v199 = vld [vmem:[#allocation5 + $0x11c] sm:$0xf]
    %v200 = vld [vmem:[#allocation5 + $0x120] sm:$0xf]
    %v201 = vld [vmem:[#allocation5 + $0x124] sm:$0xf]
    %v202 = vld [vmem:[#allocation5 + $0x128] sm:$0xf]
    %v203 = vld [vmem:[#allocation5 + $0x12c] sm:$0xf]
    %v204 = vld [vmem:[#allocation5 + $0x130] sm:$0xf]
    %v205 = vld [vmem:[#allocation5 + $0x134] sm:$0xf]
    %v206 = vld [vmem:[#allocation5 + $0x138] sm:$0xf]
    %v207 = vld [vmem:[#allocation5 + $0x13c] sm:$0xf]
    %v208 = vld [vmem:[#allocation5 + $0x140] sm:$0xf]
    %v209 = vld [vmem:[#allocation5 + $0x144] sm:$0xf]
    %v210 = vld [vmem:[#allocation5 + $0x148] sm:$0xf]
    %v211 = vld [vmem:[#allocation5 + $0x14c] sm:$0xf]
    %v212 = vld [vmem:[#allocation5 + $0x150] sm:$0xf]
    %v213 = vld [vmem:[#allocation5 + $0x154] sm:$0xf]
    %v214 = vld [vmem:[#allocation5 + $0x158] sm:$0xf]
    %v215 = vld [vmem:[#allocation5 + $0x15c] sm:$0xf]
    %v216 = vld [vmem:[#allocation5 + $0x160] sm:$0xf]
    %v217 = vld [vmem:[#allocation5 + $0x164] sm:$0xf]
    %v218 = vld [vmem:[#allocation5 + $0x168] sm:$0xf]
    %v219 = vld [vmem:[#allocation5 + $0x16c] sm:$0xf]
    %v220 = vld [vmem:[#allocation5 + $0x170] sm:$0xf]
    %v221 = vld [vmem:[#allocation5 + $0x174] sm:$0xf]
    %v222 = vld [vmem:[#allocation5 + $0x178] sm:$0xf]
    %v223 = vld [vmem:[#allocation5 + $0x17c] sm:$0xf]
    %v224 = vld [vmem:[#allocation5 + $0x180] sm:$0xf]
    %v225 = vld [vmem:[#allocation5 + $0x184] sm:$0xf]
    %v226 = vld [vmem:[#allocation5 + $0x188] sm:$0xf]
    %v227 = vld [vmem:[#allocation5 + $0x18c] sm:$0xf]
    %v228 = vld [vmem:[#allocation5 + $0x190] sm:$0xf]
    %v229 = vld [vmem:[#allocation5 + $0x194] sm:$0xf]
    %v230 = vld [vmem:[#allocation5 + $0x198] sm:$0xf]
    %v231 = vld [vmem:[#allocation5 + $0x19c] sm:$0xf]
    %v232 = vld [vmem:[#allocation5 + $0x1a0] sm:$0xf]
    %v233 = vld [vmem:[#allocation5 + $0x1a4] sm:$0xf]
    %v234 = vld [vmem:[#allocation5 + $0x1a8] sm:$0xf]
    %v235 = vld [vmem:[#allocation5 + $0x1ac] sm:$0xf]
    %v236 = vld [vmem:[#allocation5 + $0x1b0] sm:$0xf]
    %v237 = vld [vmem:[#allocation5 + $0x1b4] sm:$0xf]
    %v238 = vld [vmem:[#allocation5 + $0x1b8] sm:$0xf]
    %v239 = vld [vmem:[#allocation5 + $0x1bc] sm:$0xf]
    %v240 = vld [vmem:[#allocation5 + $0x1c0] sm:$0xf]
    %v241 = vld [vmem:[#allocation5 + $0x1c4] sm:$0xf]
    %v242 = vld [vmem:[#allocation5 + $0x1c8] sm:$0xf]
    %v243 = vld [vmem:[#allocation5 + $0x1cc] sm:$0xf]
    %v244 = vld [vmem:[#allocation5 + $0x1d0] sm:$0xf]
    %v245 = vld [vmem:[#allocation5 + $0x1d4] sm:$0xf]
    %v246 = vld [vmem:[#allocation5 + $0x1d8] sm:$0xf]
    %v247 = vld [vmem:[#allocation5 + $0x1dc] sm:$0xf]
    %v248 = vld [vmem:[#allocation5 + $0x1e0] sm:$0xf]
    %v249 = vld [vmem:[#allocation5 + $0x1e4] sm:$0xf]
    %v250 = vld [vmem:[#allocation5 + $0x1e8] sm:$0xf]
    %v251 = vld [vmem:[#allocation5 + $0x1ec] sm:$0xf]
    %v252 = vld [vmem:[#allocation5 + $0x1f0] sm:$0xf]
    %v253 = vld [vmem:[#allocation5 + $0x1f4] sm:$0xf]
    %v254 = vld [vmem:[#allocation5 + $0x1f8] sm:$0xf]
    %v255 = vld [vmem:[#allocation5 + $0x1fc] sm:$0xf]
    %v256 = vld [vmem:[%s5] sm:$0x1]
    %v258 = vlaneseq
    %v259 = vshrl.u32 %v258, 7
    %v260 = vsub.s32 0, %v259
    %v261 = vrot.slane %v256, %v260
    %v391 = vunpack.c.l.b16 %v128
    %v392 = vunpack.c.l.b16 %v129
    %v393 = vunpack.c.l.b16 %v130
    %v394 = vunpack.c.l.b16 %v131
    %v395 = vunpack.c.l.b16 %v132
    %v396 = vunpack.c.l.b16 %v133
    %v397 = vunpack.c.l.b16 %v134
    %v398 = vunpack.c.l.b16 %v135
    %v399 = vunpack.c.l.b16 %v136
    %v400 = vunpack.c.l.b16 %v137
    %v401 = vunpack.c.l.b16 %v138
    %v402 = vunpack.c.l.b16 %v139
    %v403 = vunpack.c.l.b16 %v140
    %v404 = vunpack.c.l.b16 %v141
    %v405 = vunpack.c.l.b16 %v142
    %v406 = vunpack.c.l.b16 %v143
    %v407 = vunpack.c.l.b16 %v144
    %v408 = vunpack.c.l.b16 %v145
    %v409 = vunpack.c.l.b16 %v146
    %v410 = vunpack.c.l.b16 %v147
    %v411 = vunpack.c.l.b16 %v148
    %v412 = vunpack.c.l.b16 %v149
    %v413 = vunpack.c.l.b16 %v150
    %v414 = vunpack.c.l.b16 %v151
    %v415 = vunpack.c.l.b16 %v152
    %v416 = vunpack.c.l.b16 %v153
    %v417 = vunpack.c.l.b16 %v154
    %v418 = vunpack.c.l.b16 %v155
    %v419 = vunpack.c.l.b16 %v156
    %v420 = vunpack.c.l.b16 %v157
    %v421 = vunpack.c.l.b16 %v158
    %v422 = vunpack.c.l.b16 %v159
    %v423 = vunpack.c.l.b16 %v160
    %v424 = vunpack.c.l.b16 %v161
    %v425 = vunpack.c.l.b16 %v162
    %v426 = vunpack.c.l.b16 %v163
    %v427 = vunpack.c.l.b16 %v164
    %v428 = vunpack.c.l.b16 %v165
    %v429 = vunpack.c.l.b16 %v166
    %v430 = vunpack.c.l.b16 %v167
    %v431 = vunpack.c.l.b16 %v168
    %v432 = vunpack.c.l.b16 %v169
    %v433 = vunpack.c.l.b16 %v170
    %v434 = vunpack.c.l.b16 %v171
    %v435 = vunpack.c.l.b16 %v172
    %v436 = vunpack.c.l.b16 %v173
    %v437 = vunpack.c.l.b16 %v174
    %v438 = vunpack.c.l.b16 %v175
    %v439 = vunpack.c.l.b16 %v176
    %v440 = vunpack.c.l.b16 %v177
    %v441 = vunpack.c.l.b16 %v178
    %v442 = vunpack.c.l.b16 %v179
    %v443 = vunpack.c.l.b16 %v180
    %v444 = vunpack.c.l.b16 %v181
    %v445 = vunpack.c.l.b16 %v182
    %v446 = vunpack.c.l.b16 %v183
    %v447 = vunpack.c.l.b16 %v184
    %v448 = vunpack.c.l.b16 %v185
    %v449 = vunpack.c.l.b16 %v186
    %v450 = vunpack.c.l.b16 %v187
    %v451 = vunpack.c.l.b16 %v188
    %v452 = vunpack.c.l.b16 %v189
    %v453 = vunpack.c.l.b16 %v190
    %v454 = vunpack.c.l.b16 %v191
    %v455 = vunpack.c.l.b16 %v192
    %v456 = vunpack.c.l.b16 %v193
    %v457 = vunpack.c.l.b16 %v194
    %v458 = vunpack.c.l.b16 %v195
    %v459 = vunpack.c.l.b16 %v196
    %v460 = vunpack.c.l.b16 %v197
    %v461 = vunpack.c.l.b16 %v198
    %v462 = vunpack.c.l.b16 %v199
    %v463 = vunpack.c.l.b16 %v200
    %v464 = vunpack.c.l.b16 %v201
    %v465 = vunpack.c.l.b16 %v202
    %v466 = vunpack.c.l.b16 %v203
    %v467 = vunpack.c.l.b16 %v204
    %v468 = vunpack.c.l.b16 %v205
    %v469 = vunpack.c.l.b16 %v206
    %v470 = vunpack.c.l.b16 %v207
    %v471 = vunpack.c.l.b16 %v208
    %v472 = vunpack.c.l.b16 %v209
    %v473 = vunpack.c.l.b16 %v210
    %v474 = vunpack.c.l.b16 %v211
    %v475 = vunpack.c.l.b16 %v212
    %v476 = vunpack.c.l.b16 %v213
    %v477 = vunpack.c.l.b16 %v214
    %v478 = vunpack.c.l.b16 %v215
    %v479 = vunpack.c.l.b16 %v216
    %v480 = vunpack.c.l.b16 %v217
    %v481 = vunpack.c.l.b16 %v218
    %v482 = vunpack.c.l.b16 %v219
    %v483 = vunpack.c.l.b16 %v220
    %v484 = vunpack.c.l.b16 %v221
    %v485 = vunpack.c.l.b16 %v222
    %v486 = vunpack.c.l.b16 %v223
    %v487 = vunpack.c.l.b16 %v224
    %v488 = vunpack.c.l.b16 %v225
    %v489 = vunpack.c.l.b16 %v226
    %v490 = vunpack.c.l.b16 %v227
    %v491 = vunpack.c.l.b16 %v228
    %v492 = vunpack.c.l.b16 %v229
    %v493 = vunpack.c.l.b16 %v230
    %v494 = vunpack.c.l.b16 %v231
    %v495 = vunpack.c.l.b16 %v232
    %v496 = vunpack.c.l.b16 %v233
    %v497 = vunpack.c.l.b16 %v234
    %v498 = vunpack.c.l.b16 %v235
    %v499 = vunpack.c.l.b16 %v236
    %v500 = vunpack.c.l.b16 %v237
    %v501 = vunpack.c.l.b16 %v238
    %v502 = vunpack.c.l.b16 %v239
    %v503 = vunpack.c.l.b16 %v240
    %v504 = vunpack.c.l.b16 %v241
    %v505 = vunpack.c.l.b16 %v242
    %v506 = vunpack.c.l.b16 %v243
    %v507 = vunpack.c.l.b16 %v244
    %v508 = vunpack.c.l.b16 %v245
    %v509 = vunpack.c.l.b16 %v246
    %v510 = vunpack.c.l.b16 %v247
    %v511 = vunpack.c.l.b16 %v248
    %v512 = vunpack.c.l.b16 %v249
    %v513 = vunpack.c.l.b16 %v250
    %v514 = vunpack.c.l.b16 %v251
    %v515 = vunpack.c.l.b16 %v252
    %v516 = vunpack.c.l.b16 %v253
    %v517 = vunpack.c.l.b16 %v254
    %v518 = vunpack.c.l.b16 %v255
    %v519 = vpack.c.b16 %v392, %v391
    %v520 = vpack.c.b16 %v394, %v393
    %v521 = vpack.c.b16 %v396, %v395
    %v522 = vpack.c.b16 %v398, %v397
    %v523 = vpack.c.b16 %v400, %v399
    %v524 = vpack.c.b16 %v402, %v401
    %v525 = vpack.c.b16 %v404, %v403
    %v526 = vpack.c.b16 %v406, %v405
    %v527 = vpack.c.b16 %v408, %v407
    %v528 = vpack.c.b16 %v410, %v409
    %v529 = vpack.c.b16 %v412, %v411
    %v530 = vpack.c.b16 %v414, %v413
    %v531 = vpack.c.b16 %v416, %v415
    %v532 = vpack.c.b16 %v418, %v417
    %v533 = vpack.c.b16 %v420, %v419
    %v534 = vpack.c.b16 %v422, %v421
    %v535 = vpack.c.b16 %v424, %v423
    %v536 = vpack.c.b16 %v426, %v425
    %v537 = vpack.c.b16 %v428, %v427
    %v538 = vpack.c.b16 %v430, %v429
    %v539 = vpack.c.b16 %v432, %v431
    %v540 = vpack.c.b16 %v434, %v433
    %v541 = vpack.c.b16 %v436, %v435
    %v542 = vpack.c.b16 %v438, %v437
    %v543 = vpack.c.b16 %v440, %v439
    %v544 = vpack.c.b16 %v442, %v441
    %v545 = vpack.c.b16 %v444, %v443
    %v546 = vpack.c.b16 %v446, %v445
    %v547 = vpack.c.b16 %v448, %v447
    %v548 = vpack.c.b16 %v450, %v449
    %v549 = vpack.c.b16 %v452, %v451
    %v550 = vpack.c.b16 %v454, %v453
    %v551 = vpack.c.b16 %v456, %v455
    %v552 = vpack.c.b16 %v458, %v457
    %v553 = vpack.c.b16 %v460, %v459
    %v554 = vpack.c.b16 %v462, %v461
    %v555 = vpack.c.b16 %v464, %v463
    %v556 = vpack.c.b16 %v466, %v465
    %v557 = vpack.c.b16 %v468, %v467
    %v558 = vpack.c.b16 %v470, %v469
    %v559 = vpack.c.b16 %v472, %v471
    %v560 = vpack.c.b16 %v474, %v473
    %v561 = vpack.c.b16 %v476, %v475
    %v562 = vpack.c.b16 %v478, %v477
    %v563 = vpack.c.b16 %v480, %v479
    %v564 = vpack.c.b16 %v482, %v481
    %v565 = vpack.c.b16 %v484, %v483
    %v566 = vpack.c.b16 %v486, %v485
    %v567 = vpack.c.b16 %v488, %v487
    %v568 = vpack.c.b16 %v490, %v489
    %v569 = vpack.c.b16 %v492, %v491
    %v570 = vpack.c.b16 %v494, %v493
    %v571 = vpack.c.b16 %v496, %v495
    %v572 = vpack.c.b16 %v498, %v497
    %v573 = vpack.c.b16 %v500, %v499
    %v574 = vpack.c.b16 %v502, %v501
    %v575 = vpack.c.b16 %v504, %v503
    %v576 = vpack.c.b16 %v506, %v505
    %v577 = vpack.c.b16 %v508, %v507
    %v578 = vpack.c.b16 %v510, %v509
    %v579 = vpack.c.b16 %v512, %v511
    %v580 = vpack.c.b16 %v514, %v513
    %v581 = vpack.c.b16 %v516, %v515
    %v582 = vpack.c.b16 %v518, %v517
    %647 = vmatprep.subr.bf16.mxu0 0
    %648 = vmatpush1.bf16.msra.mxu0 %v519
    %649 = vmatprep.subr.bf16.mxu0 0
    %650 = vmatpush1.bf16.msra.mxu0 %v520
    %651 = vmatprep.subr.bf16.mxu0 0
    %652 = vmatpush1.bf16.msra.mxu0 %v521
    %653 = vmatprep.subr.bf16.mxu0 0
    %654 = vmatpush1.bf16.msra.mxu0 %v522
    %655 = vmatprep.subr.bf16.mxu0 0
    %656 = vmatpush1.bf16.msra.mxu0 %v523
    %657 = vmatprep.subr.bf16.mxu0 0
    %658 = vmatpush1.bf16.msra.mxu0 %v524
    %659 = vmatprep.subr.bf16.mxu0 0
    %660 = vmatpush1.bf16.msra.mxu0 %v525
    %661 = vmatprep.subr.bf16.mxu0 0
    %662 = vmatpush1.bf16.msra.mxu0 %v526
    %663 = vmatprep.subr.bf16.mxu0 0
    %664 = vmatpush1.bf16.msra.mxu0 %v527
    %665 = vmatprep.subr.bf16.mxu0 0
    %666 = vmatpush1.bf16.msra.mxu0 %v528
    %667 = vmatprep.subr.bf16.mxu0 0
    %668 = vmatpush1.bf16.msra.mxu0 %v529
    %669 = vmatprep.subr.bf16.mxu0 0
    %670 = vmatpush1.bf16.msra.mxu0 %v530
    %671 = vmatprep.subr.bf16.mxu0 0
    %672 = vmatpush1.bf16.msra.mxu0 %v531
    %673 = vmatprep.subr.bf16.mxu0 0
    %674 = vmatpush1.bf16.msra.mxu0 %v532
    %675 = vmatprep.subr.bf16.mxu0 0
    %676 = vmatpush1.bf16.msra.mxu0 %v533
    %677 = vmatprep.subr.bf16.mxu0 0
    %678 = vmatpush1.bf16.msra.mxu0 %v534
    %679 = vmatprep.mubr.bf16.mxu0 %v121
    %680 = vmatmul.mubr.bf16.gmra.mrb[0].mxu0 %v120
    %v681 = vpop.f32.mrb[0].mxu0
    %v682 = vadd.f32 %v261, %v681
    %v683 = vpop.f32.mrb[0].mxu0
    %v684 = vpop.f32.mrb[0].mxu0
    %v685 = vpop.f32.mrb[0].mxu0
    %686 = vdwg.mxu0
    %687 = vmatprep.subr.bf16.mxu0 0
    %688 = vmatpush1.bf16.msra.mxu0 %v535
    %689 = vmatprep.subr.bf16.mxu0 0
    %690 = vmatpush1.bf16.msra.mxu0 %v536
    %691 = vmatprep.subr.bf16.mxu0 0
    %692 = vmatpush1.bf16.msra.mxu0 %v537
    %693 = vmatprep.subr.bf16.mxu0 0
    %694 = vmatpush1.bf16.msra.mxu0 %v538
    %695 = vmatprep.subr.bf16.mxu0 0
    %696 = vmatpush1.bf16.msra.mxu0 %v539
    %697 = vmatprep.subr.bf16.mxu0 0
    %698 = vmatpush1.bf16.msra.mxu0 %v540
    %699 = vmatprep.subr.bf16.mxu0 0
    %700 = vmatpush1.bf16.msra.mxu0 %v541
    %701 = vmatprep.subr.bf16.mxu0 0
    %702 = vmatpush1.bf16.msra.mxu0 %v542
    %703 = vmatprep.subr.bf16.mxu0 0
    %704 = vmatpush1.bf16.msra.mxu0 %v543
    %705 = vmatprep.subr.bf16.mxu0 0
    %706 = vmatpush1.bf16.msra.mxu0 %v544
    %707 = vmatprep.subr.bf16.mxu0 0
    %708 = vmatpush1.bf16.msra.mxu0 %v545
    %709 = vmatprep.subr.bf16.mxu0 0
    %710 = vmatpush1.bf16.msra.mxu0 %v546
    %711 = vmatprep.subr.bf16.mxu0 0
    %712 = vmatpush1.bf16.msra.mxu0 %v547
    %713 = vmatprep.subr.bf16.mxu0 0
    %714 = vmatpush1.bf16.msra.mxu0 %v548
    %715 = vmatprep.subr.bf16.mxu0 0
    %716 = vmatpush1.bf16.msra.mxu0 %v549
    %717 = vmatprep.subr.bf16.mxu0 0
    %718 = vmatpush1.bf16.msra.mxu0 %v550
    %719 = vmatprep.mubr.bf16.mxu0 %v123
    %720 = vmatmul.mubr.bf16.gmra.mrb[0].mxu0 %v122
    %v721 = vpop.f32.mrb[0].mxu0
    %v722 = vadd.f32 %v682, %v721
    %v723 = vpop.f32.mrb[0].mxu0
    %v724 = vpop.f32.mrb[0].mxu0
    %v725 = vpop.f32.mrb[0].mxu0
    %726 = vdwg.mxu0
    %727 = vmatprep.subr.bf16.mxu0 0
    %728 = vmatpush1.bf16.msra.mxu0 %v551
    %729 = vmatprep.subr.bf16.mxu0 0
    %730 = vmatpush1.bf16.msra.mxu0 %v552
    %731 = vmatprep.subr.bf16.mxu0 0
    %732 = vmatpush1.bf16.msra.mxu0 %v553
    %733 = vmatprep.subr.bf16.mxu0 0
    %734 = vmatpush1.bf16.msra.mxu0 %v554
    %735 = vmatprep.subr.bf16.mxu0 0
    %736 = vmatpush1.bf16.msra.mxu0 %v555
    %737 = vmatprep.subr.bf16.mxu0 0
    %738 = vmatpush1.bf16.msra.mxu0 %v556
    %739 = vmatprep.subr.bf16.mxu0 0
    %740 = vmatpush1.bf16.msra.mxu0 %v557
    %741 = vmatprep.subr.bf16.mxu0 0
    %742 = vmatpush1.bf16.msra.mxu0 %v558
    %743 = vmatprep.subr.bf16.mxu0 0
    %744 = vmatpush1.bf16.msra.mxu0 %v559
    %745 = vmatprep.subr.bf16.mxu0 0
    %746 = vmatpush1.bf16.msra.mxu0 %v560
    %747 = vmatprep.subr.bf16.mxu0 0
    %748 = vmatpush1.bf16.msra.mxu0 %v561
    %749 = vmatprep.subr.bf16.mxu0 0
    %750 = vmatpush1.bf16.msra.mxu0 %v562
    %751 = vmatprep.subr.bf16.mxu0 0
    %752 = vmatpush1.bf16.msra.mxu0 %v563
    %753 = vmatprep.subr.bf16.mxu0 0
    %754 = vmatpush1.bf16.msra.mxu0 %v564
    %755 = vmatprep.subr.bf16.mxu0 0
    %756 = vmatpush1.bf16.msra.mxu0 %v565
    %757 = vmatprep.subr.bf16.mxu0 0
    %758 = vmatpush1.bf16.msra.mxu0 %v566
    %759 = vmatprep.mubr.bf16.mxu0 %v125
    %760 = vmatmul.mubr.bf16.gmra.mrb[0].mxu0 %v124
    %v761 = vpop.f32.mrb[0].mxu0
    %v762 = vadd.f32 %v722, %v761
    %v763 = vpop.f32.mrb[0].mxu0
    %v764 = vpop.f32.mrb[0].mxu0
    %v765 = vpop.f32.mrb[0].mxu0
    %766 = vdwg.mxu0
    %767 = vmatprep.subr.bf16.mxu0 0
    %768 = vmatpush1.bf16.msra.mxu0 %v567
    %769 = vmatprep.subr.bf16.mxu0 0
    %770 = vmatpush1.bf16.msra.mxu0 %v568
    %771 = vmatprep.subr.bf16.mxu0 0
    %772 = vmatpush1.bf16.msra.mxu0 %v569
    %773 = vmatprep.subr.bf16.mxu0 0
    %774 = vmatpush1.bf16.msra.mxu0 %v570
    %775 = vmatprep.subr.bf16.mxu0 0
    %776 = vmatpush1.bf16.msra.mxu0 %v571
    %777 = vmatprep.subr.bf16.mxu0 0
    %778 = vmatpush1.bf16.msra.mxu0 %v572
    %779 = vmatprep.subr.bf16.mxu0 0
    %780 = vmatpush1.bf16.msra.mxu0 %v573
    %781 = vmatprep.subr.bf16.mxu0 0
    %782 = vmatpush1.bf16.msra.mxu0 %v574
    %783 = vmatprep.subr.bf16.mxu0 0
    %784 = vmatpush1.bf16.msra.mxu0 %v575
    %785 = vmatprep.subr.bf16.mxu0 0
    %786 = vmatpush1.bf16.msra.mxu0 %v576
    %787 = vmatprep.subr.bf16.mxu0 0
    %788 = vmatpush1.bf16.msra.mxu0 %v577
    %789 = vmatprep.subr.bf16.mxu0 0
    %790 = vmatpush1.bf16.msra.mxu0 %v578
    %791 = vmatprep.subr.bf16.mxu0 0
    %792 = vmatpush1.bf16.msra.mxu0 %v579
    %793 = vmatprep.subr.bf16.mxu0 0
    %794 = vmatpush1.bf16.msra.mxu0 %v580
    %795 = vmatprep.subr.bf16.mxu0 0
    %796 = vmatpush1.bf16.msra.mxu0 %v581
    %797 = vmatprep.subr.bf16.mxu0 0
    %798 = vmatpush1.bf16.msra.mxu0 %v582
    %799 = vmatprep.mubr.bf16.mxu0 %v127
    %800 = vmatmul.mubr.bf16.gmra.mrb[0].mxu0 %v126
    %v801 = vpop.f32.mrb[0].mxu0
    %v802 = vadd.f32 %v762, %v801
    %v803 = vpop.f32.mrb[0].mxu0
    %v804 = vpop.f32.mrb[0].mxu0
    %v805 = vpop.f32.mrb[0].mxu0
    %806 = vdwg.mxu0
    %vm807 = vcmp.ge.f32.partialorder %v802, 0.0
    %v808 = vmul.f32 %v802, 0.33
    %v809 = vsel %vm807, %v802, %v808
    %v810 = vld [vmem:[%s2] sm:$0xf]
    %v811 = vunpack.c.l.bf16 %v810
    %v812 = vmul.f32 %v809, %v811
    %v813 = vpack.c.bf16 %v812, %v812
    %v814 = vld [vmem:[#allocation7] sm:$0xf]
    %v815 = vld [vmem:[#allocation7 + $0x4] sm:$0xf]
    %v816 = vld [vmem:[#allocation7 + $0x8] sm:$0xf]
    %v817 = vld [vmem:[#allocation7 + $0xc] sm:$0xf]
    %v818 = vld [vmem:[#allocation7 + $0x10] sm:$0xf]
    %v819 = vld [vmem:[#allocation7 + $0x14] sm:$0xf]
    %v820 = vld [vmem:[#allocation7 + $0x18] sm:$0xf]
    %v821 = vld [vmem:[#allocation7 + $0x1c] sm:$0xf]
    %v822 = vld [vmem:[#allocation7 + $0x20] sm:$0xf]
    %v823 = vld [vmem:[#allocation7 + $0x24] sm:$0xf]
    %v824 = vld [vmem:[#allocation7 + $0x28] sm:$0xf]
    %v825 = vld [vmem:[#allocation7 + $0x2c] sm:$0xf]
    %v826 = vld [vmem:[#allocation7 + $0x30] sm:$0xf]
    %v827 = vld [vmem:[#allocation7 + $0x34] sm:$0xf]
    %v828 = vld [vmem:[#allocation7 + $0x38] sm:$0xf]
    %v829 = vld [vmem:[#allocation7 + $0x3c] sm:$0xf]
    %v830 = vld [vmem:[%s1] sm:$0xff]
    %v831 = vpack.c.bf16 %v830, %v830
    %v832 = vld [vmem:[%s7] sm:$0x3]
    %vm833 = vcmask 31744
    %v835 = vsel %vm833, %v831, 0
    %vm837 = vcmask 1041408
    %v839 = vsel %vm837, %v832, 0
    %841 = vmatprep.subr.bf16.mxu0 0
    %842 = vmatpush1.bf16.msra.mxu0 %v839
    %843 = vmatprep.subr.bf16.mxu0 0
    %844 = vmatpush1.bf16.msra.mxu0 0
    %845 = vmatprep.subr.bf16.mxu0 0
    %846 = vmatpush1.bf16.msra.mxu0 0
    %847 = vmatprep.subr.bf16.mxu0 0
    %848 = vmatpush1.bf16.msra.mxu0 0
    %849 = vmatprep.subr.bf16.mxu0 0
    %850 = vmatpush1.bf16.msra.mxu0 0
    %851 = vmatprep.subr.bf16.mxu0 0
    %852 = vmatpush1.bf16.msra.mxu0 0
    %853 = vmatprep.subr.bf16.mxu0 0
    %854 = vmatpush1.bf16.msra.mxu0 0
    %855 = vmatprep.subr.bf16.mxu0 0
    %856 = vmatpush1.bf16.msra.mxu0 0
    %857 = vmatprep.subr.bf16.mxu0 0
    %858 = vmatpush1.bf16.msra.mxu0 0
    %859 = vmatprep.subr.bf16.mxu0 0
    %860 = vmatpush1.bf16.msra.mxu0 0
    %861 = vmatprep.subr.bf16.mxu0 0
    %862 = vmatpush1.bf16.msra.mxu0 0
    %863 = vmatprep.subr.bf16.mxu0 0
    %864 = vmatpush1.bf16.msra.mxu0 0
    %865 = vmatprep.subr.bf16.mxu0 0
    %866 = vmatpush1.bf16.msra.mxu0 0
    %867 = vmatprep.subr.bf16.mxu0 0
    %868 = vmatpush1.bf16.msra.mxu0 0
    %869 = vmatprep.subr.bf16.mxu0 0
    %870 = vmatpush1.bf16.msra.mxu0 0
    %871 = vmatprep.subr.bf16.mxu0 0
    %872 = vmatpush1.bf16.msra.mxu0 0
    %873 = vmatprep.mubr.bf16.mxu0 0
    %874 = vmatmul.mubr.bf16.gmra.mrb[0].mxu0 %v835
    %v875 = vpop.f32.mrb[0].mxu0
    %v876 = vadd.f32 0.0, %v875
    %v877 = vpop.f32.mrb[0].mxu0
    %v878 = vpop.f32.mrb[0].mxu0
    %v879 = vpop.f32.mrb[0].mxu0
    %880 = vdwg.mxu0
    %v897 = vunpack.c.l.b16 %v814
    %v898 = vunpack.c.l.b16 %v815
    %v899 = vunpack.c.l.b16 %v816
    %v900 = vunpack.c.l.b16 %v817
    %v901 = vunpack.c.l.b16 %v818
    %v902 = vunpack.c.l.b16 %v819
    %v903 = vunpack.c.l.b16 %v820
    %v904 = vunpack.c.l.b16 %v821
    %v905 = vunpack.c.l.b16 %v822
    %v906 = vunpack.c.l.b16 %v823
    %v907 = vunpack.c.l.b16 %v824
    %v908 = vunpack.c.l.b16 %v825
    %v909 = vunpack.c.l.b16 %v826
    %v910 = vunpack.c.l.b16 %v827
    %v911 = vunpack.c.l.b16 %v828
    %v912 = vunpack.c.l.b16 %v829
    %v913 = vpack.c.b16 %v898, %v897
    %v914 = vpack.c.b16 %v900, %v899
    %v915 = vpack.c.b16 %v902, %v901
    %v916 = vpack.c.b16 %v904, %v903
    %v917 = vpack.c.b16 %v906, %v905
    %v918 = vpack.c.b16 %v908, %v907
    %v919 = vpack.c.b16 %v910, %v909
    %v920 = vpack.c.b16 %v912, %v911
    %929 = vmatprep.subr.bf16.mxu0 0
    %930 = vmatpush1.bf16.msra.mxu0 %v913
    %931 = vmatprep.subr.bf16.mxu0 0
    %932 = vmatpush1.bf16.msra.mxu0 %v914
    %933 = vmatprep.subr.bf16.mxu0 0
    %934 = vmatpush1.bf16.msra.mxu0 %v915
    %935 = vmatprep.subr.bf16.mxu0 0
    %936 = vmatpush1.bf16.msra.mxu0 %v916
    %937 = vmatprep.subr.bf16.mxu0 0
    %938 = vmatpush1.bf16.msra.mxu0 %v917
    %939 = vmatprep.subr.bf16.mxu0 0
    %940 = vmatpush1.bf16.msra.mxu0 %v918
    %941 = vmatprep.subr.bf16.mxu0 0
    %942 = vmatpush1.bf16.msra.mxu0 %v919
    %943 = vmatprep.subr.bf16.mxu0 0
    %944 = vmatpush1.bf16.msra.mxu0 %v920
    %945 = vmatprep.subr.bf16.mxu0 0
    %946 = vmatpush1.bf16.msra.mxu0 0
    %947 = vmatprep.subr.bf16.mxu0 0
    %948 = vmatpush1.bf16.msra.mxu0 0
    %949 = vmatprep.subr.bf16.mxu0 0
    %950 = vmatpush1.bf16.msra.mxu0 0
    %951 = vmatprep.subr.bf16.mxu0 0
    %952 = vmatpush1.bf16.msra.mxu0 0
    %953 = vmatprep.subr.bf16.mxu0 0
    %954 = vmatpush1.bf16.msra.mxu0 0
    %955 = vmatprep.subr.bf16.mxu0 0
    %956 = vmatpush1.bf16.msra.mxu0 0
    %957 = vmatprep.subr.bf16.mxu0 0
    %958 = vmatpush1.bf16.msra.mxu0 0
    %959 = vmatprep.subr.bf16.mxu0 0
    %960 = vmatpush1.bf16.msra.mxu0 0
    %961 = vmatprep.mubr.bf16.mxu0 0
    %962 = vmatmul.mubr.bf16.gmra.mrb[0].mxu0 %v813
    %v963 = vpop.f32.mrb[0].mxu0
    %v964 = vadd.f32 %v876, %v963
    %v965 = vpop.f32.mrb[0].mxu0
    %v966 = vpop.f32.mrb[0].mxu0
    %v967 = vpop.f32.mrb[0].mxu0
    %968 = vdwg.mxu0
    %v969 = vld [vmem:[%s8] sm:$0x1]
    %v971 = vlaneseq
    %v972 = vshrl.u32 %v971, 7
    %v973 = vsub.s32 0, %v972
    %v974 = vrot.slane %v969, %v973
    %v976 = vadd.f32 %v964, %v974
    %vm977 = vcmp.ge.f32.partialorder %v976, 0.0
    %v978 = vmul.f32 %v976, 0.33
    %v979 = vsel %vm977, %v976, %v978
    %v980 = vld [vmem:[%s3] sm:$0xf]
    %v981 = vunpack.c.l.bf16 %v980
    %v982 = vmul.f32 %v979, %v981
    %v983 = vpack.c.bf16 %v982, %v982
    %v984 = vld [vmem:[#allocation8] sm:$0xf]
    %v985 = vld [vmem:[#allocation8 + $0x4] sm:$0xf]
    %v986 = vld [vmem:[#allocation8 + $0x8] sm:$0xf]
    %v987 = vld [vmem:[#allocation8 + $0xc] sm:$0xf]
    %v988 = vld [vmem:[#allocation8 + $0x10] sm:$0xf]
    %v989 = vld [vmem:[#allocation8 + $0x14] sm:$0xf]
    %v990 = vld [vmem:[#allocation8 + $0x18] sm:$0xf]
    %v991 = vld [vmem:[#allocation8 + $0x1c] sm:$0xf]
    %v992 = vld [vmem:[#allocation8 + $0x20] sm:$0xf]
    %v993 = vld [vmem:[#allocation8 + $0x24] sm:$0xf]
    %v994 = vld [vmem:[#allocation8 + $0x28] sm:$0xf]
    %v995 = vld [vmem:[#allocation8 + $0x2c] sm:$0xf]
    %v996 = vld [vmem:[#allocation8 + $0x30] sm:$0xf]
    %v997 = vld [vmem:[#allocation8 + $0x34] sm:$0xf]
    %v998 = vld [vmem:[#allocation8 + $0x38] sm:$0xf]
    %v999 = vld [vmem:[#allocation8 + $0x3c] sm:$0xf]
    %v1000 = vld [vmem:[%s10] sm:$0x1]
    %v1002 = vlaneseq
    %v1003 = vshrl.u32 %v1002, 7
    %v1004 = vsub.s32 0, %v1003
    %v1005 = vrot.slane %v1000, %v1004
    %v1023 = vunpack.c.l.b16 %v984
    %v1024 = vunpack.c.l.b16 %v985
    %v1025 = vunpack.c.l.b16 %v986
    %v1026 = vunpack.c.l.b16 %v987
    %v1027 = vunpack.c.l.b16 %v988
    %v1028 = vunpack.c.l.b16 %v989
    %v1029 = vunpack.c.l.b16 %v990
    %v1030 = vunpack.c.l.b16 %v991
    %v1031 = vunpack.c.l.b16 %v992
    %v1032 = vunpack.c.l.b16 %v993
    %v1033 = vunpack.c.l.b16 %v994
    %v1034 = vunpack.c.l.b16 %v995
    %v1035 = vunpack.c.l.b16 %v996
    %v1036 = vunpack.c.l.b16 %v997
    %v1037 = vunpack.c.l.b16 %v998
    %v1038 = vunpack.c.l.b16 %v999
    %v1039 = vpack.c.b16 %v1024, %v1023
    %v1040 = vpack.c.b16 %v1026, %v1025
    %v1041 = vpack.c.b16 %v1028, %v1027
    %v1042 = vpack.c.b16 %v1030, %v1029
    %v1043 = vpack.c.b16 %v1032, %v1031
    %v1044 = vpack.c.b16 %v1034, %v1033
    %v1045 = vpack.c.b16 %v1036, %v1035
    %v1046 = vpack.c.b16 %v1038, %v1037
    %1055 = vmatprep.subr.bf16.mxu0 0
    %1056 = vmatpush1.bf16.msra.mxu0 %v1039
    %1057 = vmatprep.subr.bf16.mxu0 0
    %1058 = vmatpush1.bf16.msra.mxu0 %v1040
    %1059 = vmatprep.subr.bf16.mxu0 0
    %1060 = vmatpush1.bf16.msra.mxu0 %v1041
    %1061 = vmatprep.subr.bf16.mxu0 0
    %1062 = vmatpush1.bf16.msra.mxu0 %v1042
    %1063 = vmatprep.subr.bf16.mxu0 0
    %1064 = vmatpush1.bf16.msra.mxu0 %v1043
    %1065 = vmatprep.subr.bf16.mxu0 0
    %1066 = vmatpush1.bf16.msra.mxu0 %v1044
    %1067 = vmatprep.subr.bf16.mxu0 0
    %1068 = vmatpush1.bf16.msra.mxu0 %v1045
    %1069 = vmatprep.subr.bf16.mxu0 0
    %1070 = vmatpush1.bf16.msra.mxu0 %v1046
    %1071 = vmatprep.subr.bf16.mxu0 0
    %1072 = vmatpush1.bf16.msra.mxu0 0
    %1073 = vmatprep.subr.bf16.mxu0 0
    %1074 = vmatpush1.bf16.msra.mxu0 0
    %1075 = vmatprep.subr.bf16.mxu0 0
    %1076 = vmatpush1.bf16.msra.mxu0 0
    %1077 = vmatprep.subr.bf16.mxu0 0
    %1078 = vmatpush1.bf16.msra.mxu0 0
    %1079 = vmatprep.subr.bf16.mxu0 0
    %1080 = vmatpush1.bf16.msra.mxu0 0
    %1081 = vmatprep.subr.bf16.mxu0 0
    %1082 = vmatpush1.bf16.msra.mxu0 0
    %1083 = vmatprep.subr.bf16.mxu0 0
    %1084 = vmatpush1.bf16.msra.mxu0 0
    %1085 = vmatprep.subr.bf16.mxu0 0
    %1086 = vmatpush1.bf16.msra.mxu0 0
    %1087 = vmatprep.mubr.bf16.mxu0 0
    %1088 = vmatmul.mubr.bf16.gmra.mrb[0].mxu0 %v983
    %v1089 = vpop.f32.mrb[0].mxu0
    %v1090 = vadd.f32 %v1005, %v1089
    %v1091 = vpop.f32.mrb[0].mxu0
    %v1092 = vpop.f32.mrb[0].mxu0
    %v1093 = vpop.f32.mrb[0].mxu0
    %1094 = vdwg.mxu0
    %vm1095 = vcmp.ge.f32.partialorder %v1090, 0.0
    %v1096 = vmul.f32 %v1090, 0.33
    %v1097 = vsel %vm1095, %v1090, %v1096
    %v1098 = vpack.c.bf16 %v1097, %v1097
    %v1099 = vld [vmem:[#allocation10] sm:$0xf]
    %v1100 = vld [vmem:[#allocation10 + $0x4] sm:$0xf]
    %v1101 = vld [vmem:[#allocation10 + $0x8] sm:$0xf]
    %v1102 = vld [vmem:[#allocation10 + $0xc] sm:$0xf]
    %v1103 = vld [vmem:[#allocation10 + $0x10] sm:$0xf]
    %v1104 = vld [vmem:[#allocation10 + $0x14] sm:$0xf]
    %v1105 = vld [vmem:[#allocation10 + $0x18] sm:$0xf]
    %v1106 = vld [vmem:[#allocation10 + $0x1c] sm:$0xf]
    %v1107 = vld [vmem:[#allocation10 + $0x20] sm:$0xf]
    %v1108 = vld [vmem:[#allocation10 + $0x24] sm:$0xf]
    %v1109 = vld [vmem:[#allocation10 + $0x28] sm:$0xf]
    %v1110 = vld [vmem:[#allocation10 + $0x2c] sm:$0xf]
    %v1111 = vld [vmem:[#allocation10 + $0x30] sm:$0xf]
    %v1112 = vld [vmem:[#allocation10 + $0x34] sm:$0xf]
    %v1113 = vld [vmem:[#allocation10 + $0x38] sm:$0xf]
    %v1114 = vld [vmem:[#allocation10 + $0x3c] sm:$0xf]
    %v1115 = vld [vmem:[%s12] sm:$0x1]
    %v1117 = vlaneseq
    %v1118 = vshrl.u32 %v1117, 7
    %v1119 = vsub.s32 0, %v1118
    %v1120 = vrot.slane %v1115, %v1119
    %v1138 = vunpack.c.l.b16 %v1099
    %v1139 = vunpack.c.l.b16 %v1100
    %v1140 = vunpack.c.l.b16 %v1101
    %v1141 = vunpack.c.l.b16 %v1102
    %v1142 = vunpack.c.l.b16 %v1103
    %v1143 = vunpack.c.l.b16 %v1104
    %v1144 = vunpack.c.l.b16 %v1105
    %v1145 = vunpack.c.l.b16 %v1106
    %v1146 = vunpack.c.l.b16 %v1107
    %v1147 = vunpack.c.l.b16 %v1108
    %v1148 = vunpack.c.l.b16 %v1109
    %v1149 = vunpack.c.l.b16 %v1110
    %v1150 = vunpack.c.l.b16 %v1111
    %v1151 = vunpack.c.l.b16 %v1112
    %v1152 = vunpack.c.l.b16 %v1113
    %v1153 = vunpack.c.l.b16 %v1114
    %v1154 = vpack.c.b16 %v1139, %v1138
    %v1155 = vpack.c.b16 %v1141, %v1140
    %v1156 = vpack.c.b16 %v1143, %v1142
    %v1157 = vpack.c.b16 %v1145, %v1144
    %v1158 = vpack.c.b16 %v1147, %v1146
    %v1159 = vpack.c.b16 %v1149, %v1148
    %v1160 = vpack.c.b16 %v1151, %v1150
    %v1161 = vpack.c.b16 %v1153, %v1152
    %1170 = vmatprep.subr.bf16.mxu0 0
    %1171 = vmatpush1.bf16.msra.mxu0 %v1154
    %1172 = vmatprep.subr.bf16.mxu0 0
    %1173 = vmatpush1.bf16.msra.mxu0 %v1155
    %1174 = vmatprep.subr.bf16.mxu0 0
    %1175 = vmatpush1.bf16.msra.mxu0 %v1156
    %1176 = vmatprep.subr.bf16.mxu0 0
    %1177 = vmatpush1.bf16.msra.mxu0 %v1157
    %1178 = vmatprep.subr.bf16.mxu0 0
    %1179 = vmatpush1.bf16.msra.mxu0 %v1158
    %1180 = vmatprep.subr.bf16.mxu0 0
    %1181 = vmatpush1.bf16.msra.mxu0 %v1159
    %1182 = vmatprep.subr.bf16.mxu0 0
    %1183 = vmatpush1.bf16.msra.mxu0 %v1160
    %1184 = vmatprep.subr.bf16.mxu0 0
    %1185 = vmatpush1.bf16.msra.mxu0 %v1161
    %1186 = vmatprep.subr.bf16.mxu0 0
    %1187 = vmatpush1.bf16.msra.mxu0 0
    %1188 = vmatprep.subr.bf16.mxu0 0
    %1189 = vmatpush1.bf16.msra.mxu0 0
    %1190 = vmatprep.subr.bf16.mxu0 0
    %1191 = vmatpush1.bf16.msra.mxu0 0
    %1192 = vmatprep.subr.bf16.mxu0 0
    %1193 = vmatpush1.bf16.msra.mxu0 0
    %1194 = vmatprep.subr.bf16.mxu0 0
    %1195 = vmatpush1.bf16.msra.mxu0 0
    %1196 = vmatprep.subr.bf16.mxu0 0
    %1197 = vmatpush1.bf16.msra.mxu0 0
    %1198 = vmatprep.subr.bf16.mxu0 0
    %1199 = vmatpush1.bf16.msra.mxu0 0
    %1200 = vmatprep.subr.bf16.mxu0 0
    %1201 = vmatpush1.bf16.msra.mxu0 0
    %1202 = vmatprep.mubr.bf16.mxu0 0
    %1203 = vmatmul.mubr.bf16.gmra.mrb[0].mxu0 %v1098
    %v1204 = vpop.f32.mrb[0].mxu0
    %v1205 = vadd.f32 %v1120, %v1204
    %v1206 = vpop.f32.mrb[0].mxu0
    %v1207 = vpop.f32.mrb[0].mxu0
    %v1208 = vpop.f32.mrb[0].mxu0
    %1209 = vdwg.mxu0
    %vm1210 = vcmp.ge.f32.partialorder %v1205, 0.0
    %v1211 = vmul.f32 %v1205, 0.33
    %v1212 = vsel %vm1210, %v1205, %v1211
    %1213 = vst [vmem:[#allocation11] sm:$0xff] %v1212
    // Predicated region
    $region74: #{tpu_custom_call.1} parent=1 // pred_check
      _
    $region75: #{tpu_custom_call.1} parent=1 // pred_check_branch
      %1215 = sbr.rel (0) target = $region77
    $region76: #{tpu_custom_call.1} parent=1 // pred_region
      %s1217 = ssub.s32 128, 128
      %1218 = vsyncadd [#allocation4], %s1217
      %s1220 = sshll.u32 [#allocation11], 4
      %s1221 = int_to_ptr.vmem [resolvable:$true] %s1220
      %1223 = dma.vmem_to_hbm [thread:$0]  %s1221, 128, %s13, [#allocation4]
    $region77: #{tpu_custom_call.1} parent=1 // pred_fallthru
      _
    // Predicated region
    $region78: #{tpu_custom_call.1} parent=1 // pred_check
      _
    $region79: #{tpu_custom_call.1} parent=1 // pred_check_branch
      %1225 = sbr.rel (0) target = $region81
    $region80: #{tpu_custom_call.1} parent=1 // pred_region
      %1226 = dma.done [#allocation4], 128
    $region81: #{tpu_custom_call.1} parent=1 // pred_fallthru
      _
    %1227 = vsyncpa [#allocation3], 1
    %1228 = vsyncpa [#allocation6], 1
    %1229 = vsyncpa [#allocation9], 1
    %1230 = vsyncpa [#allocation4], 1

</llo_original>
